<compile_context>
chip_gen: v6e
topology: v6e:2x2x1
jax: 0.10.0
libtpu: 0.0.40
codegen_flags: <defaults>
</compile_context>

<pallas_src>
import functools
import math

import jax
import jax.numpy as jnp
from jax.experimental import pallas as pl
from jax.experimental.pallas import tpu as pltpu

S_SCALE = 30.0
MARGIN = 0.4
EPS = 1e-7            # clamp eps from the module
NORM_EPS = 1e-12      # F.normalize default eps

# Hoisted to trace-time Python floats (never recomputed per grid step).
COS_M = float(math.cos(MARGIN))
SIN_M = float(math.sin(MARGIN))


def _arcloss_kernel(x_ref, w_ref, labels_ref, wtgt_ref, cos_ref, loss_ref,
                    xn_ref, t_ref, exp_acc_ref, *, c_valid):
    # x_ref:      (B_t, D)    native dtype
    # w_ref:      (C_t, D)    native dtype (weight tile, NATIVE nn.Linear layout)
    # labels_ref: (B_t, 1)    int32
    # wtgt_ref:   (B_t, D)    pre-gathered target weight rows W[label]
    # cos_ref:    (B_t, C_t)  output tile of cos_theta (un-normalized W)
    # loss_ref:   (B_t, 1)    per-row L (written on the last class tile)
    # xn_ref:     (B_t, D)    scratch: normalized x rows (input dtype)
    # t_ref:      (B_t, 1)    scratch f32: target logit
    # exp_acc_ref:(B_t, 1)    scratch f32: running sum of exp(s*cos), target excluded
    j = pl.program_id(1)

    @pl.when(j == 0)
    def _init():
        x = x_ref[...].astype(jnp.float32)
        sumsq = jnp.sum(x * x, axis=1, keepdims=True)
        # max(||x||, eps) == sqrt(max(||x||^2, eps^2)) -> rsqrt on the EUP.
        inv_norm = jax.lax.rsqrt(jnp.maximum(sumsq, NORM_EPS * NORM_EPS))
        xn = x * inv_norm
        xn_ref[...] = xn.astype(xn_ref.dtype)
        # Target logit once per batch tile (one XLU reduction total, instead of
        # a masked reduction in every class-tile step).
        t_ref[...] = jnp.sum(xn * wtgt_ref[...].astype(jnp.float32),
                             axis=1, keepdims=True)
        exp_acc_ref[...] = jnp.zeros_like(exp_acc_ref)

    # (B_t, D) x (C_t, D) contracted on D -> (B_t, C_t), f32 MXU accumulation.
    cos = jax.lax.dot_general(
        xn_ref[...], w_ref[...],
        dimension_numbers=(((1,), (1,)), ((), ())),
        preferred_element_type=jnp.float32)
    cos_ref[...] = cos.astype(cos_ref.dtype)

    b_t, c_t = cos.shape
    # j-independent iota: put the j*c_t offset on the (B_t, 1)/scalar side.
    local_ids = jax.lax.broadcasted_iota(jnp.int32, (b_t, c_t), 1)
    keep = local_ids != (labels_ref[...] - j * c_t)      # drop target column
    if c_valid is not None:
        # Only emitted when the class dim was padded: drop padded columns.
        keep = jnp.logical_and(keep, local_ids < (c_valid - j * c_t))
    e = jnp.where(keep, jnp.exp(S_SCALE * cos), 0.0)
    exp_acc_ref[...] += jnp.sum(e, axis=1, keepdims=True)

    @pl.when(j == pl.num_programs(1) - 1)
    def _finalize():
        t = jnp.clip(t_ref[...], -1.0 + EPS, 1.0 - EPS)
        numerator = S_SCALE * (t * COS_M - jnp.sqrt(1.0 - t * t) * SIN_M)
        # exp_acc already excludes the target column -> no cancellation.
        denominator = jnp.exp(numerator) + exp_acc_ref[...]
        loss_ref[...] = numerator - jnp.log(denominator)


def _round_up(v, m):
    return (v + m - 1) // m * m


def _vmem_capacity_bytes():
    try:
        return int(pltpu.get_tpu_info().vmem_capacity_bytes)
    except Exception:
        return 64 * 1024 * 1024   # conservative (v7x per-TC) fallback


@functools.partial(jax.jit, static_argnames=("b_tile", "c_tile"))
def arc_loss(x, weight, labels, *, b_tile=None, c_tile=None):
    B, D = x.shape
    C, D2 = weight.shape
    assert D == D2

    # Tile defaults: big batch tiles cut repeated-weight HBM traffic (kernel is
    # HBM-bound at small b_tile); keep >= 2 batch tiles when B > 8 so the
    # "parallel" axis can shard across v7x's two TensorCores.
    if b_tile is None:
        b_tile = min(512, _round_up(B, 8))
        if B > 8 and _round_up(B, b_tile) // b_tile < 2:
            b_tile = _round_up((B + 1) // 2, 8)
    if c_tile is None:
        c_tile = min(2048, _round_up(C, 128))
    b_tile = _round_up(b_tile, 8)
    c_tile = _round_up(c_tile, 128)

    b_pad = _round_up(B, b_tile)
    c_pad = _round_up(C, c_tile)
    d_pad = _round_up(D, 128)

    out_dtype = jnp.result_type(x.dtype, weight.dtype)
    labels_i32 = labels.astype(jnp.int32)

    # Pad to tile multiples (zeros are harmless: they add 0 to norms/dots; the
    # padded class columns are masked out of the exp-sum inside the kernel).
    # Weight keeps its native (C, D) layout: no transposed HBM copy per call.
    x_p = jnp.pad(x, ((0, b_pad - B), (0, d_pad - D)))
    w_p = jnp.pad(weight, ((0, c_pad - C), (0, d_pad - D)))
    labels_p = jnp.pad(labels_i32, (0, b_pad - B)).reshape(b_pad, 1)
    wtgt_p = jnp.pad(jnp.take(weight, labels_i32, axis=0),
                     ((0, b_pad - B), (0, d_pad - D)))

    c_valid = C if c_pad != C else None
    kernel = functools.partial(_arcloss_kernel, c_valid=c_valid)

    grid = (b_pad // b_tile, c_pad // c_tile)

    # Explicit VMEM budget only when the double-buffered estimate exceeds the
    # smallest scoped default (v5e: 16 MiB); cap generation-aware.
    itemx = jnp.dtype(x.dtype).itemsize
    itemw = jnp.dtype(weight.dtype).itemsize
    itemo = jnp.dtype(out_dtype).itemsize
    x_bytes = b_tile * d_pad * itemx
    w_bytes = c_tile * d_pad * itemw
    wtgt_bytes = b_tile * d_pad * itemw
    cos_bytes = b_tile * c_tile * itemo
    small = 3 * b_tile * 128 * 4                 # (B_t,1) tiles pad to 128 lanes
    scratch = b_tile * d_pad * itemx + 2 * b_tile * 128 * 4
    est = 2 * (x_bytes + w_bytes + wtgt_bytes + cos_bytes + small) + scratch
    vmem_limit = None
    if est > 8 * 1024 * 1024:
        cap = _vmem_capacity_bytes()
        vmem_limit = max(min(int(est * 1.5), int(cap * 0.75)), 16 * 1024 * 1024)

    cos_pad, loss_rows = pl.pallas_call(
        kernel,
        out_shape=(
            jax.ShapeDtypeStruct((b_pad, c_pad), out_dtype),
            jax.ShapeDtypeStruct((b_pad, 1), jnp.float32),
        ),
        grid_spec=pltpu.PrefetchScalarGridSpec(
            num_scalar_prefetch=0,
            grid=grid,
            in_specs=[
                pl.BlockSpec((b_tile, d_pad), lambda i, j: (i, 0)),   # x
                pl.BlockSpec((c_tile, d_pad), lambda i, j: (j, 0)),   # weight (native)
                pl.BlockSpec((b_tile, 1), lambda i, j: (i, 0)),       # labels
                pl.BlockSpec((b_tile, d_pad), lambda i, j: (i, 0)),   # W[label]
            ],
            out_specs=[
                pl.BlockSpec((b_tile, c_tile), lambda i, j: (i, j)),  # cos_theta
                pl.BlockSpec((b_tile, 1), lambda i, j: (i, 0)),       # per-row L
            ],
            scratch_shapes=[
                pltpu.VMEM((b_tile, d_pad), x.dtype),    # cached normalized x
                pltpu.VMEM((b_tile, 1), jnp.float32),    # target logit
                pltpu.VMEM((b_tile, 1), jnp.float32),    # exp-sum (target excluded)
            ],
        ),
        compiler_params=pltpu.CompilerParams(
            dimension_semantics=("parallel", "arbitrary"),
            vmem_limit_bytes=vmem_limit,
        ),
    )(x_p, w_p, labels_p, wtgt_p)

    cos_theta = cos_pad[:B, :C]
    loss = -jnp.mean(loss_rows[:B, 0])
    return cos_theta, loss


def arc_loss_ref(x, weight, labels):
    """Pure-JAX reference mirroring the PyTorch forward exactly."""
    xn = x / jnp.maximum(jnp.linalg.norm(x, axis=1, keepdims=True), NORM_EPS)
    cos = xn @ weight.T
    t = cos[jnp.arange(x.shape[0]), labels]
    t = jnp.clip(t, -1.0 + EPS, 1.0 - EPS)
    num = S_SCALE * jnp.cos(jnp.arccos(t) + MARGIN)
    mask = jax.nn.one_hot(labels, weight.shape[0], dtype=bool)
    excl = jnp.sum(jnp.where(mask, 0.0, jnp.exp(S_SCALE * cos)), axis=1)
    denom = jnp.exp(num) + excl
    L = num - jnp.log(denom)
    return cos, -jnp.mean(L)


if __name__ == "__main__":
    key = jax.random.PRNGKey(0)
    k_x, k_w, k_l = jax.random.split(key, 3)

    # Small but padding/tiling-exercising shapes: D pads 96->128, C pads
    # 200->256, and with b_tile=8 / c_tile=128 the grid is (2, 2) so the
    # cross-class-tile accumulation, padding mask and finalize paths are all
    # exercised.
    B, in_features, out_features = 16, 96, 200

    x = jax.random.normal(k_x, (B, in_features), dtype=jnp.float32)
    # Deterministic nn.Linear-style init: U(-1/sqrt(in), 1/sqrt(in)).
    bound = 1.0 / math.sqrt(in_features)
    weight = jax.random.uniform(
        k_w, (out_features, in_features), minval=-bound, maxval=bound,
        dtype=jnp.float32,
    )
    labels = jax.random.randint(k_l, (B,), 0, out_features, dtype=jnp.int32)

    cos_theta, loss = arc_loss(x, weight, labels, b_tile=8, c_tile=128)
    jax.block_until_ready((cos_theta, loss))

    # Also exercise the default (auto-tile) path once.
    cos_auto, loss_auto = arc_loss(x, weight, labels)
    jax.block_until_ready((cos_auto, loss_auto))

    cos_ref, loss_ref_v = arc_loss_ref(x, weight, labels)
    assert cos_theta.shape == (B, out_features)
    assert jnp.allclose(cos_theta, cos_ref, atol=3e-5, rtol=1e-5), float(
        jnp.max(jnp.abs(cos_theta - cos_ref)))
    assert jnp.allclose(loss, loss_ref_v, atol=3e-4, rtol=1e-4), (
        float(loss), float(loss_ref_v))
    assert jnp.allclose(cos_auto, cos_ref, atol=3e-5, rtol=1e-5)
    assert jnp.allclose(loss_auto, loss_ref_v, atol=3e-4, rtol=1e-4)

    print("KERNEL_OK")
</pallas_src>

<mosaic_0001>
module attributes {stable_mosaic.version = 11 : i64} {
  func.func @_arcloss_kernel(%arg0: i32, %arg1: i32, %arg2: memref<8x128xf32, #tpu.memory_space<vmem>>, %arg3: memref<128x128xf32, #tpu.memory_space<vmem>>, %arg4: memref<8x1xi32, #tpu.memory_space<vmem>>, %arg5: memref<8x128xf32, #tpu.memory_space<vmem>>, %arg6: memref<8x128xf32, #tpu.memory_space<vmem>>, %arg7: memref<8x1xf32, #tpu.memory_space<vmem>>, %arg8: memref<8x128xf32, #tpu.memory_space<vmem>>, %arg9: memref<8x1xf32, #tpu.memory_space<vmem>>, %arg10: memref<8x1xf32, #tpu.memory_space<vmem>>) attributes {dimension_semantics = [#tpu.dimension_semantics<parallel>, #tpu.dimension_semantics<arbitrary>], iteration_bounds = array<i64: 2, 2>, scalar_prefetch = 0 : i64, scratch_operands = 3 : i64, tpu.core_type = #tpu.core_type<tc>, window_params = [{transform_indices = @transform_0, window_bounds = array<i64: 8, 128>}, {transform_indices = @transform_1, window_bounds = array<i64: 128, 128>}, {transform_indices = @transform_2, window_bounds = array<i64: 8, 1>}, {transform_indices = @transform_3, window_bounds = array<i64: 8, 128>}, {transform_indices = @transform_4, window_bounds = array<i64: 8, 128>}, {transform_indices = @transform_5, window_bounds = array<i64: 8, 1>}]} {
    %c0_i32 = arith.constant 0 : i32
    %0 = arith.cmpi eq, %arg1, %c0_i32 : i32
    %1 = arith.extui %0 : i1 to i32
    %c0_i32_0 = arith.constant 0 : i32
    %2 = arith.cmpi ne, %1, %c0_i32_0 : i32
    scf.if %2 {
      %c0_17 = arith.constant 0 : index
      %c0_18 = arith.constant 0 : index
      %32 = vector.load %arg2[%c0_17, %c0_18] : memref<8x128xf32, #tpu.memory_space<vmem>>, vector<8x128xf32>
      %33 = arith.mulf %32, %32 : vector<8x128xf32>
      %cst_19 = arith.constant dense<0.000000e+00> : vector<8xf32>
      %34 = vector.multi_reduction <add>, %33, %cst_19 [1] : vector<8x128xf32> to vector<8xf32>
      %35 = vector.shape_cast %34 : vector<8xf32> to vector<8x1xf32>
      %cst_20 = arith.constant 1.000000e-24 : f32
      %36 = vector.broadcast %cst_20 : f32 to vector<8x1xf32>
      %37 = arith.maximumf %35, %36 : vector<8x1xf32>
      %38 = math.rsqrt %37 : vector<8x1xf32>
      %39 = vector.broadcast %38 : vector<8x1xf32> to vector<8x128xf32>
      %40 = arith.mulf %32, %39 : vector<8x128xf32>
      %c0_21 = arith.constant 0 : index
      %c0_22 = arith.constant 0 : index
      %41 = vector.load %arg8[%c0_21, %c0_22] : memref<8x128xf32, #tpu.memory_space<vmem>>, vector<8x128xf32>
      tpu.vector_store %arg8[%c0_21, %c0_22], %40 {strides = array<i32>} : memref<8x128xf32, #tpu.memory_space<vmem>>, vector<8x128xf32>,
      %c0_23 = arith.constant 0 : index
      %c0_24 = arith.constant 0 : index
      %42 = vector.load %arg5[%c0_23, %c0_24] : memref<8x128xf32, #tpu.memory_space<vmem>>, vector<8x128xf32>
      %43 = arith.mulf %40, %42 : vector<8x128xf32>
      %cst_25 = arith.constant dense<0.000000e+00> : vector<8xf32>
      %44 = vector.multi_reduction <add>, %43, %cst_25 [1] : vector<8x128xf32> to vector<8xf32>
      %45 = vector.shape_cast %44 : vector<8xf32> to vector<8x1xf32>
      %c0_26 = arith.constant 0 : index
      %c0_27 = arith.constant 0 : index
      %46 = vector.load %arg9[%c0_26, %c0_27] : memref<8x1xf32, #tpu.memory_space<vmem>>, vector<8x1xf32>
      tpu.vector_store %arg9[%c0_26, %c0_27], %45 {strides = array<i32>} : memref<8x1xf32, #tpu.memory_space<vmem>>, vector<8x1xf32>,
      %cst_28 = arith.constant 0.000000e+00 : f32
      %47 = vector.broadcast %cst_28 : f32 to vector<8x1xf32>
      %c0_29 = arith.constant 0 : index
      %c0_30 = arith.constant 0 : index
      %48 = vector.load %arg10[%c0_29, %c0_30] : memref<8x1xf32, #tpu.memory_space<vmem>>, vector<8x1xf32>
      tpu.vector_store %arg10[%c0_29, %c0_30], %47 {strides = array<i32>} : memref<8x1xf32, #tpu.memory_space<vmem>>, vector<8x1xf32>,
    } else {
    }
    %c0 = arith.constant 0 : index
    %c0_1 = arith.constant 0 : index
    %3 = vector.load %arg8[%c0, %c0_1] : memref<8x128xf32, #tpu.memory_space<vmem>>, vector<8x128xf32>
    %c0_2 = arith.constant 0 : index
    %c0_3 = arith.constant 0 : index
    %4 = vector.load %arg3[%c0_2, %c0_3] : memref<128x128xf32, #tpu.memory_space<vmem>>, vector<128x128xf32>
    %cst = arith.constant dense<0.000000e+00> : vector<8x128xf32>
    %5 = tpu.matmul %3, %4, %cst {dimension_numbers = #tpu.dot_dimension_numbers<[1], [1], [0], [0], [0, 0, 1, 0], [], []>} : vector<8x128xf32>, vector<128x128xf32>, vector<8x128xf32> -> vector<8x128xf32>
    %c0_4 = arith.constant 0 : index
    %c0_5 = arith.constant 0 : index
    %6 = vector.load %arg6[%c0_4, %c0_5] : memref<8x128xf32, #tpu.memory_space<vmem>>, vector<8x128xf32>
    tpu.vector_store %arg6[%c0_4, %c0_5], %5 {strides = array<i32>} : memref<8x128xf32, #tpu.memory_space<vmem>>, vector<8x128xf32>,
    %7 = tpu.iota {dimensions = array<i32: 1>} : vector<8x128xi32>
    %c0_6 = arith.constant 0 : index
    %c0_7 = arith.constant 0 : index
    %8 = vector.load %arg4[%c0_6, %c0_7] : memref<8x1xi32, #tpu.memory_space<vmem>>, vector<8x1xi32>
    %c128_i32 = arith.constant 128 : i32
    %9 = arith.muli %arg1, %c128_i32 : i32
    %10 = vector.broadcast %9 : i32 to vector<8x1xi32>
    %11 = arith.subi %8, %10 : vector<8x1xi32>
    %12 = vector.broadcast %11 : vector<8x1xi32> to vector<8x128xi32>
    %13 = arith.cmpi ne, %7, %12 : vector<8x128xi32>
    %c128_i32_8 = arith.constant 128 : i32
    %14 = arith.muli %arg1, %c128_i32_8 : i32
    %c200_i32 = arith.constant 200 : i32
    %15 = arith.subi %c200_i32, %14 : i32
    %16 = vector.broadcast %15 : i32 to vector<8x128xi32>
    %17 = arith.cmpi slt, %7, %16 : vector<8x128xi32>
    %18 = arith.andi %13, %17 : vector<8x128xi1>
    %cst_9 = arith.constant 3.000000e+01 : f32
    %19 = vector.broadcast %cst_9 : f32 to vector<8x128xf32>
    %20 = arith.mulf %19, %5 : vector<8x128xf32>
    %21 = math.exp %20 : vector<8x128xf32>
    %cst_10 = arith.constant 0.000000e+00 : f32
    %22 = vector.broadcast %cst_10 : f32 to vector<8x128xf32>
    %23 = arith.select %18, %21, %22 : vector<8x128xi1>, vector<8x128xf32>
    %c0_11 = arith.constant 0 : index
    %c0_12 = arith.constant 0 : index
    %24 = vector.load %arg10[%c0_11, %c0_12] : memref<8x1xf32, #tpu.memory_space<vmem>>, vector<8x1xf32>
    %cst_13 = arith.constant dense<0.000000e+00> : vector<8xf32>
    %25 = vector.multi_reduction <add>, %23, %cst_13 [1] : vector<8x128xf32> to vector<8xf32>
    %26 = vector.shape_cast %25 : vector<8xf32> to vector<8x1xf32>
    %27 = arith.addf %24, %26 : vector<8x1xf32>
    %c0_14 = arith.constant 0 : index
    %c0_15 = arith.constant 0 : index
    %28 = vector.load %arg10[%c0_14, %c0_15] : memref<8x1xf32, #tpu.memory_space<vmem>>, vector<8x1xf32>
    tpu.vector_store %arg10[%c0_14, %c0_15], %27 {strides = array<i32>} : memref<8x1xf32, #tpu.memory_space<vmem>>, vector<8x1xf32>,
    %c1_i32 = arith.constant 1 : i32
    %29 = arith.cmpi eq, %arg1, %c1_i32 : i32
    %30 = arith.extui %29 : i1 to i32
    %c0_i32_16 = arith.constant 0 : i32
    %31 = arith.cmpi ne, %30, %c0_i32_16 : i32
    scf.if %31 {
      %c0_17 = arith.constant 0 : index
      %c0_18 = arith.constant 0 : index
      %32 = vector.load %arg9[%c0_17, %c0_18] : memref<8x1xf32, #tpu.memory_space<vmem>>, vector<8x1xf32>
      %cst_19 = arith.constant -0.99999988 : f32
      %cst_20 = arith.constant 0.99999988 : f32
      %33 = vector.broadcast %cst_19 : f32 to vector<8x1xf32>
      %34 = arith.maximumf %33, %32 : vector<8x1xf32>
      %35 = vector.broadcast %cst_20 : f32 to vector<8x1xf32>
      %36 = arith.minimumf %35, %34 : vector<8x1xf32>
      %cst_21 = arith.constant 0.921060979 : f32
      %37 = vector.broadcast %cst_21 : f32 to vector<8x1xf32>
      %38 = arith.mulf %36, %37 : vector<8x1xf32>
      %39 = arith.mulf %36, %36 : vector<8x1xf32>
      %cst_22 = arith.constant 1.000000e+00 : f32
      %40 = vector.broadcast %cst_22 : f32 to vector<8x1xf32>
      %41 = arith.subf %40, %39 : vector<8x1xf32>
      %42 = math.sqrt %41 : vector<8x1xf32>
      %cst_23 = arith.constant 0.389418334 : f32
      %43 = vector.broadcast %cst_23 : f32 to vector<8x1xf32>
      %44 = arith.mulf %42, %43 : vector<8x1xf32>
      %45 = arith.subf %38, %44 : vector<8x1xf32>
      %cst_24 = arith.constant 3.000000e+01 : f32
      %46 = vector.broadcast %cst_24 : f32 to vector<8x1xf32>
      %47 = arith.mulf %46, %45 : vector<8x1xf32>
      %48 = math.exp %47 : vector<8x1xf32>
      %c0_25 = arith.constant 0 : index
      %c0_26 = arith.constant 0 : index
      %49 = vector.load %arg10[%c0_25, %c0_26] : memref<8x1xf32, #tpu.memory_space<vmem>>, vector<8x1xf32>
      %50 = arith.addf %48, %49 : vector<8x1xf32>
      %51 = math.log %50 : vector<8x1xf32>
      %52 = arith.subf %47, %51 : vector<8x1xf32>
      %c0_27 = arith.constant 0 : index
      %c0_28 = arith.constant 0 : index
      %53 = vector.load %arg7[%c0_27, %c0_28] : memref<8x1xf32, #tpu.memory_space<vmem>>, vector<8x1xf32>
      tpu.vector_store %arg7[%c0_27, %c0_28], %52 {strides = array<i32>} : memref<8x1xf32, #tpu.memory_space<vmem>>, vector<8x1xf32>,
    } else {
    }
    return
  }
  func.func @transform_0(%arg0: i32, %arg1: i32) -> (i32, i32) {
    %c0_i32 = arith.constant 0 : i32
    %c0_i32_0 = arith.constant 0 : i32
    return %arg0, %c0_i32 : i32, i32
  }
  func.func @transform_1(%arg0: i32, %arg1: i32) -> (i32, i32) {
    %c0_i32 = arith.constant 0 : i32
    %c0_i32_0 = arith.constant 0 : i32
    return %arg1, %c0_i32 : i32, i32
  }
  func.func @transform_2(%arg0: i32, %arg1: i32) -> (i32, i32) {
    %c0_i32 = arith.constant 0 : i32
    %c0_i32_0 = arith.constant 0 : i32
    return %arg0, %c0_i32 : i32, i32
  }
  func.func @transform_3(%arg0: i32, %arg1: i32) -> (i32, i32) {
    %c0_i32 = arith.constant 0 : i32
    %c0_i32_0 = arith.constant 0 : i32
    return %arg0, %c0_i32 : i32, i32
  }
  func.func @transform_4(%arg0: i32, %arg1: i32) -> (i32, i32) {
    %c0_i32 = arith.constant 0 : i32
    return %arg0, %arg1 : i32, i32
  }
  func.func @transform_5(%arg0: i32, %arg1: i32) -> (i32, i32) {
    %c0_i32 = arith.constant 0 : i32
    %c0_i32_0 = arith.constant 0 : i32
    return %arg0, %c0_i32 : i32, i32
  }
}

</mosaic_0001>

<llo_original>
// kernel: arc_loss.1
$region0: #{arc_loss.1}
  #allocation0 [shape = 'u32[]', space=smem, size = 0x4, offset = 0x4, fixed_abs, tag = 'smem constant byte address 0x4 - core index']
  #allocation1 [shape = 'u32[144,128]{1,0:T(1,128)}', space=vmem, size = 0x12000, scoped, tag = 'internal scratch']
  #allocation2 [shape = 'f32[8,128]{1,0:T(8,128)}', space=vmem, size = 0x1000, scoped, tag = 'scratch operand']
  #allocation3 [shape = 'f32[8,1]{1,0:T(8,128)}', space=vmem, size = 0x1000, scoped, tag = 'scratch operand']
  #allocation4 [shape = 'f32[8,1]{1,0:T(8,128)}', space=vmem, size = 0x1000, scoped, tag = 'scratch operand']
  %s0 = inlined_call_operand.vmem [shape: f32[16,128], index: 0, kind: input, shape index: {}]
  %s1 = inlined_call_operand.vmem [shape: f32[256,128], index: 1, kind: input, shape index: {}]
  %s2 = inlined_call_operand.vmem [shape: s32[16,1], index: 2, kind: input, shape index: {}]
  %s3 = inlined_call_operand.vmem [shape: f32[16,128], index: 3, kind: input, shape index: {}]
  %s4 = inlined_call_operand.hbm [shape: f32[16,256], index: 4, kind: output, shape index: {0}]
  %s5 = inlined_call_operand.vmem [shape: f32[16,1], index: 5, kind: output, shape index: {1}]
  %6 = xla_tuple %s4, %s5
  %s7 = sld [smem:[#allocation0]]
  $region65: #{arc_loss.1} parent=0
    _
  %s9 = ssub.s32 1, %s7
  %s10 = scalar_select 0, %s9, %s7
  $region1: #{arc_loss.1} parent=0
    #allocation5 [shape = 'u8[8192]{0}', space=vmem, size = 0x2000, scoped, tag = 'output window, operand 0']
    #allocation6 [shape = 's32[2]{0}', space=sflag, size = 0x8, scoped, tag = 'scoped memory for arc_loss.1']
    %11 = vsyncpa [#allocation6], 0
    %s12 = scalar_lea.sflag [#allocation6], 1
    %13 = vsyncpa %s12, 0
    loop: start=0, step=1, limit=6
    $region2: #{arc_loss.1} parent=1 // loop_pre_header
      _
    $region3: #{arc_loss.1} parent=1 // loop_header
      %s15 = sphi 0, %s19
      %p16 = scmp.ge.s32.totalorder %s15, 6
      %s22 = sphi 0, %s34
      %s23 = sphi 0, %s30
      %s24 = sphi 0, %s22
      %s25 = sphi 0, %s23
      %s26 = sphi 0, %s24
      %s27 = sphi 0, %s25
      %s37 = sphi 0, %s39
      %s40 = sphi 0, %s37
      %s41 = sphi 0, %s40
      %s57 = sphi 0, %s41
      %s63 = sphi 0, %s65
      %s66 = sphi 0, %s63
      %s67 = sphi 0, %s66
      %s83 = sphi 0, %s67
      %s89 = sphi 0, %s91
      %s92 = sphi 0, %s89
      %s93 = sphi 0, %s92
      %s109 = sphi 0, %s93
      %s115 = sphi 0, %s117
      %s118 = sphi 0, %s115
      %s119 = sphi 0, %s118
      %s135 = sphi 0, %s119
      %s143 = sphi 0, %s145
      %s146 = sphi 0, %s143
      %s147 = sphi 0, %s146
      %s163 = sphi 0, %s147
      %s169 = sphi 0, %s171
      %s172 = sphi 0, %s169
      %s173 = sphi 0, %s172
      %s189 = sphi 0, %s173
    $region4: #{arc_loss.1} parent=1 // loop_header_branch
      %18 = sbr.rel (%p16) target = $region8
    $region5: #{arc_loss.1} parent=1 // loop_body
      %s20 = ssub.s32 %s15, 1
      %s21 = ssub.s32 %s15, 2
      %s28 = sadd.s32 1, %s23
      %p29 = scmp.ge.s32.totalorder %s28, 2
      %s30 = scalar_select %p29, 0, %s28
      %s31 = sadd.s32 1, %s22
      %s32 = scalar_select %p29, %s31, %s22
      %p33 = scmp.ge.s32.totalorder %s32, 2
      %s34 = scalar_select %p33, 0, %s32
      %s35 = ssub.s32 %s22, %s34
      %p36 = scmp.eq.s32.totalorder %s35, 0
      %s38 = sadd.s32 %s37, 1
      %s39 = scalar_select %p36, %s37, %s38
      %p42 = pneg %p36
      %p43 = scmp.eq.s32.totalorder %s15, 3
      %p44 = por %p42, %p43
      %p45 = scmp.ne.s32.totalorder %s37, %s40
      %p46 = scmp.eq.s32.totalorder %s15, 0
      %p47 = por %p45, %p46
      %p48 = scmp.ne.s32.totalorder %s37, %s40
      %p49 = scmp.eq.s32.totalorder %s20, 3
      %p50 = por %p48, %p49
      %p51 = scmp.ne.s32.totalorder %s40, %s41
      %p52 = scmp.eq.s32.totalorder %s20, 0
      %p53 = por %p51, %p52
      %p54 = scmp.ne.s32.totalorder %s40, %s41
      %p55 = scmp.eq.s32.totalorder %s21, 3
      %p56 = por %p54, %p55
      %p58 = scmp.ne.s32.totalorder %s41, %s57
      %p59 = scmp.eq.s32.totalorder %s21, 0
      %p60 = por %p58, %p59
      %s61 = ssub.s32 %s23, %s30
      %p62 = scmp.eq.s32.totalorder %s61, 0
      %s64 = sadd.s32 %s63, 1
      %s65 = scalar_select %p62, %s63, %s64
      %p68 = pneg %p62
      %p69 = scmp.eq.s32.totalorder %s15, 3
      %p70 = por %p68, %p69
      %p71 = scmp.ne.s32.totalorder %s63, %s66
      %p72 = scmp.eq.s32.totalorder %s15, 0
      %p73 = por %p71, %p72
      %p74 = scmp.ne.s32.totalorder %s63, %s66
      %p75 = scmp.eq.s32.totalorder %s20, 3
      %p76 = por %p74, %p75
      %p77 = scmp.ne.s32.totalorder %s66, %s67
      %p78 = scmp.eq.s32.totalorder %s20, 0
      %p79 = por %p77, %p78
      %p80 = scmp.ne.s32.totalorder %s66, %s67
      %p81 = scmp.eq.s32.totalorder %s21, 3
      %p82 = por %p80, %p81
      %p84 = scmp.ne.s32.totalorder %s67, %s83
      %p85 = scmp.eq.s32.totalorder %s21, 0
      %p86 = por %p84, %p85
      %s87 = ssub.s32 %s22, %s34
      %p88 = scmp.eq.s32.totalorder %s87, 0
      %s90 = sadd.s32 %s89, 1
      %s91 = scalar_select %p88, %s89, %s90
      %p94 = pneg %p88
      %p95 = scmp.eq.s32.totalorder %s15, 3
      %p96 = por %p94, %p95
      %p97 = scmp.ne.s32.totalorder %s89, %s92
      %p98 = scmp.eq.s32.totalorder %s15, 0
      %p99 = por %p97, %p98
      %p100 = scmp.ne.s32.totalorder %s89, %s92
      %p101 = scmp.eq.s32.totalorder %s20, 3
      %p102 = por %p100, %p101
      %p103 = scmp.ne.s32.totalorder %s92, %s93
      %p104 = scmp.eq.s32.totalorder %s20, 0
      %p105 = por %p103, %p104
      %p106 = scmp.ne.s32.totalorder %s92, %s93
      %p107 = scmp.eq.s32.totalorder %s21, 3
      %p108 = por %p106, %p107
      %p110 = scmp.ne.s32.totalorder %s93, %s109
      %p111 = scmp.eq.s32.totalorder %s21, 0
      %p112 = por %p110, %p111
      %s113 = ssub.s32 %s22, %s34
      %p114 = scmp.eq.s32.totalorder %s113, 0
      %s116 = sadd.s32 %s115, 1
      %s117 = scalar_select %p114, %s115, %s116
      %p120 = pneg %p114
      %p121 = scmp.eq.s32.totalorder %s15, 3
      %p122 = por %p120, %p121
      %p123 = scmp.ne.s32.totalorder %s115, %s118
      %p124 = scmp.eq.s32.totalorder %s15, 0
      %p125 = por %p123, %p124
      %p126 = scmp.ne.s32.totalorder %s115, %s118
      %p127 = scmp.eq.s32.totalorder %s20, 3
      %p128 = por %p126, %p127
      %p129 = scmp.ne.s32.totalorder %s118, %s119
      %p130 = scmp.eq.s32.totalorder %s20, 0
      %p131 = por %p129, %p130
      %p132 = scmp.ne.s32.totalorder %s118, %s119
      %p133 = scmp.eq.s32.totalorder %s21, 3
      %p134 = por %p132, %p133
      %p136 = scmp.ne.s32.totalorder %s119, %s135
      %p137 = scmp.eq.s32.totalorder %s21, 0
      %p138 = por %p136, %p137
      %s139 = ssub.s32 %s22, %s34
      %s140 = ssub.s32 %s23, %s30
      %s141 = sor.u32 %s139, %s140
      %p142 = scmp.eq.s32.totalorder %s141, 0
      %s144 = sadd.s32 %s143, 1
      %s145 = scalar_select %p142, %s143, %s144
      %p148 = pneg %p142
      %p149 = scmp.eq.s32.totalorder %s15, 3
      %p150 = por %p148, %p149
      %p151 = scmp.ne.s32.totalorder %s143, %s146
      %p152 = scmp.eq.s32.totalorder %s15, 0
      %p153 = por %p151, %p152
      %p154 = scmp.ne.s32.totalorder %s143, %s146
      %p155 = scmp.eq.s32.totalorder %s20, 3
      %p156 = por %p154, %p155
      %p157 = scmp.ne.s32.totalorder %s146, %s147
      %p158 = scmp.eq.s32.totalorder %s20, 0
      %p159 = por %p157, %p158
      %p160 = scmp.ne.s32.totalorder %s146, %s147
      %p161 = scmp.eq.s32.totalorder %s21, 3
      %p162 = por %p160, %p161
      %p164 = scmp.ne.s32.totalorder %s147, %s163
      %p165 = scmp.eq.s32.totalorder %s21, 0
      %p166 = por %p164, %p165
      %s167 = ssub.s32 %s22, %s34
      %p168 = scmp.eq.s32.totalorder %s167, 0
      %s170 = sadd.s32 %s169, 1
      %s171 = scalar_select %p168, %s169, %s170
      %p174 = pneg %p168
      %p175 = scmp.eq.s32.totalorder %s15, 3
      %p176 = por %p174, %p175
      %p177 = scmp.ne.s32.totalorder %s169, %s172
      %p178 = scmp.eq.s32.totalorder %s15, 0
      %p179 = por %p177, %p178
      %p180 = scmp.ne.s32.totalorder %s169, %s172
      %p181 = scmp.eq.s32.totalorder %s20, 3
      %p182 = por %p180, %p181
      %p183 = scmp.ne.s32.totalorder %s172, %s173
      %p184 = scmp.eq.s32.totalorder %s20, 0
      %p185 = por %p183, %p184
      %p186 = scmp.ne.s32.totalorder %s172, %s173
      %p187 = scmp.eq.s32.totalorder %s21, 3
      %p188 = por %p186, %p187
      %p190 = scmp.ne.s32.totalorder %s173, %s189
      %p191 = scmp.eq.s32.totalorder %s21, 0
      %p192 = por %p190, %p191
      %p193 = scmp.le.s32.totalorder 1, %s15
      %p194 = scmp.lt.s32.totalorder %s15, 5
      %p195 = pnand %p193, %p194
      %p196 = pneg %p195
      // Predicated region
      $region9: #{arc_loss.1} parent=5 // pred_check
        _
      $region10: #{arc_loss.1} parent=5 // pred_check_branch
        %198 = sbr.rel (%p195) target = $region12
      $region11: #{arc_loss.1} parent=5 // pred_region
        %s199 = ssub.s32 %s15, 1
      $region12: #{arc_loss.1} parent=5 // pred_fallthru
        _
      %p200 = scmp.lt.s32.totalorder %s15, 4
      // Predicated region
      $region13: #{arc_loss.1} parent=5 // pred_check
        %p201 = pneg %p200
      $region14: #{arc_loss.1} parent=5 // pred_check_branch
        %203 = sbr.rel (%p201) target = $region16
      $region15: #{arc_loss.1} parent=5 // pred_region
        // Predicated region
        $region17: #{arc_loss.1} parent=15 // pred_check
          %p204 = pneg %p47
        $region18: #{arc_loss.1} parent=15 // pred_check_branch
          %206 = sbr.rel (%p204) target = $region20
        $region19: #{arc_loss.1} parent=15 // pred_region
          %p207 = scmp.lt.s32.totalorder %s22, 1
          %s208 = scalar_select %p207, %s22, 1
          %s209 = smul.addr %s208, 8
          %s210 = scalar_lea.vmem %s0, %s209
        $region20: #{arc_loss.1} parent=15 // pred_fallthru
          _
        // Predicated region
        $region21: #{arc_loss.1} parent=15 // pred_check
          %p211 = pneg %p73
        $region22: #{arc_loss.1} parent=15 // pred_check_branch
          %213 = sbr.rel (%p211) target = $region24
        $region23: #{arc_loss.1} parent=15 // pred_region
          %s214 = smul.u32 16, %s23
          %p215 = scmp.lt.s32.totalorder %s214, 31
          %s216 = scalar_select %p215, %s214, 31
          %s217 = smul.addr %s216, 8
          %s218 = scalar_lea.vmem %s1, %s217
          %s219 = smul.u32 16, %s23
        $region24: #{arc_loss.1} parent=15 // pred_fallthru
          _
        // Predicated region
        $region25: #{arc_loss.1} parent=15 // pred_check
          %p220 = pneg %p99
        $region26: #{arc_loss.1} parent=15 // pred_check_branch
          %222 = sbr.rel (%p220) target = $region28
        $region27: #{arc_loss.1} parent=15 // pred_region
          %p223 = scmp.lt.s32.totalorder %s22, 1
          %s224 = scalar_select %p223, %s22, 1
          %s225 = smul.addr %s224, 8
          %s226 = scalar_lea.vmem %s2, %s225
        $region28: #{arc_loss.1} parent=15 // pred_fallthru
          _
        // Predicated region
        $region29: #{arc_loss.1} parent=15 // pred_check
          %p227 = pneg %p125
        $region30: #{arc_loss.1} parent=15 // pred_check_branch
          %229 = sbr.rel (%p227) target = $region32
        $region31: #{arc_loss.1} parent=15 // pred_region
          %p230 = scmp.lt.s32.totalorder %s22, 1
          %s231 = scalar_select %p230, %s22, 1
          %s232 = smul.addr %s231, 8
          %s233 = scalar_lea.vmem %s3, %s232
        $region32: #{arc_loss.1} parent=15 // pred_fallthru
          _
      $region16: #{arc_loss.1} parent=5 // pred_fallthru
        _
      %p234 = scmp.le.s32.totalorder 1, %s15
      %p235 = scmp.lt.s32.totalorder %s15, 5
      %p236 = pnand %p234, %p235
      %p237 = pneg %p236
      // Predicated region
      $region33: #{arc_loss.1} parent=5 // pred_check
        _
      $region34: #{arc_loss.1} parent=5 // pred_check_branch
        %239 = sbr.rel (%p236) target = $region36
      $region35: #{arc_loss.1} parent=5 // pred_region
        %s240 = ssub.s32 %s15, 1
        %p241 = scmp.lt.s32.totalorder %s24, 1
        %s242 = scalar_select %p241, %s24, 1
        %s243 = smul.addr %s242, 8
        %s244 = scalar_lea.vmem %s0, %s243
        %p245 = pneg %p53
        %p246 = pneg %p50
        %s247 = smul.u32 16, %s25
        %p248 = scmp.lt.s32.totalorder %s247, 31
        %s249 = scalar_select %p248, %s247, 31
        %s250 = smul.addr %s249, 8
        %s251 = scalar_lea.vmem %s1, %s250
        %p252 = pneg %p79
        %p253 = pneg %p76
        %p254 = scmp.lt.s32.totalorder %s24, 1
        %s255 = scalar_select %p254, %s24, 1
        %s256 = smul.addr %s255, 8
        %s257 = scalar_lea.vmem %s2, %s256
        %p258 = pneg %p105
        %p259 = pneg %p102
        %p260 = scmp.lt.s32.totalorder %s24, 1
        %s261 = scalar_select %p260, %s24, 1
        %s262 = smul.addr %s261, 8
        %s263 = scalar_lea.vmem %s3, %s262
        %p264 = pneg %p131
        %p265 = pneg %p128
        %p266 = pneg %p159
        %p267 = pneg %p156
        %s268 = sand.u32 %s146, 1
        %s269 = scalar_lea.sflag [#allocation6], %s268
        %s270 = sand.u32 %s146, 1
        %s271 = smul.addr %s270, 8
        %s272 = scalar_lea.vmem [#allocation5], %s271
        %p273 = pneg %p185
        %p274 = pneg %p182
        %p275 = scmp.lt.s32.totalorder %s24, 1
        %s276 = scalar_select %p275, %s24, 1
        %s277 = smul.addr %s276, 8
        %s278 = scalar_lea.vmem %s5, %s277
        %p279 = scmp.lt.s32.totalorder %s24, 1
        %s280 = scalar_select %p279, %s24, 1
        %s281 = smul.addr %s280, 8
        %s282 = scalar_lea.vmem %s0, %s281
        %s283 = smul.u32 16, %s25
        %p284 = scmp.lt.s32.totalorder %s283, 31
        %s285 = scalar_select %p284, %s283, 31
        %s286 = smul.addr %s285, 8
        %s287 = scalar_lea.vmem %s1, %s286
        %s288 = smul.u32 16, %s25
        %p289 = scmp.lt.s32.totalorder %s24, 1
        %s290 = scalar_select %p289, %s24, 1
        %s291 = smul.addr %s290, 8
        %s292 = scalar_lea.vmem %s2, %s291
        %p293 = scmp.lt.s32.totalorder %s24, 1
        %s294 = scalar_select %p293, %s24, 1
        %s295 = smul.addr %s294, 8
        %s296 = scalar_lea.vmem %s3, %s295
        %p297 = scmp.lt.s32.totalorder %s24, 1
        %s298 = scalar_select %p297, %s24, 1
        %s299 = smul.addr %s298, 8
        %s300 = scalar_lea.vmem %s5, %s299
        %p301 = scmp.eq.s32.totalorder %s25, 0
        // Predicated region
        $region37: #{arc_loss.1} parent=35 // pred_check
          %p302 = pneg %p301
        $region38: #{arc_loss.1} parent=35 // pred_check_branch
          %304 = sbr.rel (%p302) target = $region40
        $region39: #{arc_loss.1} parent=35 // pred_region
          %v305 = vld [vmem:[%s282] sm:$0xff]
          %v306 = vmul.f32 %v305, %v305
          %307 = vadd.xlane.f32.xlu0 %v306
          %v308 = vpop.xlane.xlu0 %307
          %v309 = vmax.f32 %v308, 1e-24
          %v310 = vrsqrt.pop %v309
          %v311 = vmul.f32 %v305, %v310
          %312 = vst [vmem:[#allocation2] sm:$0xff] %v311
          %v313 = vld [vmem:[%s296] sm:$0xff]
          %v314 = vmul.f32 %v311, %v313
          %315 = vadd.xlane.f32.xlu0 %v314
          %v316 = vpop.xlane.xlu0 %315
          %vm317 = vcmask 7168
          %318 = vst.msk [vmem:[#allocation3] sm:$0xff] %vm317, %v316
          %319 = vst.msk [vmem:[#allocation4] sm:$0xff] %vm317, 0.0
        $region40: #{arc_loss.1} parent=35 // pred_fallthru
          _
        %v320 = vld [vmem:[#allocation2] sm:$0xff]
        %v321 = vld [vmem:[%s287] sm:$0xff]
        %v322 = vld [vmem:[%s287 + $0x8] sm:$0xff]
        %v323 = vld [vmem:[%s287 + $0x10] sm:$0xff]
        %v324 = vld [vmem:[%s287 + $0x18] sm:$0xff]
        %v325 = vld [vmem:[%s287 + $0x20] sm:$0xff]
        %v326 = vld [vmem:[%s287 + $0x28] sm:$0xff]
        %v327 = vld [vmem:[%s287 + $0x30] sm:$0xff]
        %v328 = vld [vmem:[%s287 + $0x38] sm:$0xff]
        %v329 = vld [vmem:[%s287 + $0x40] sm:$0xff]
        %v330 = vld [vmem:[%s287 + $0x48] sm:$0xff]
        %v331 = vld [vmem:[%s287 + $0x50] sm:$0xff]
        %v332 = vld [vmem:[%s287 + $0x58] sm:$0xff]
        %v333 = vld [vmem:[%s287 + $0x60] sm:$0xff]
        %v334 = vld [vmem:[%s287 + $0x68] sm:$0xff]
        %v335 = vld [vmem:[%s287 + $0x70] sm:$0xff]
        %v336 = vld [vmem:[%s287 + $0x78] sm:$0xff]
        %337 = vmatprep.subr.mxu0 0.0
        %338 = vmatpush1.xpose.msra.mxu0 %v336
        %339 = vmatprep.subr.mxu0 0.0
        %340 = vmatpush1.xpose.msra.mxu0 %v335
        %341 = vmatprep.subr.mxu0 0.0
        %342 = vmatpush1.xpose.msra.mxu0 %v334
        %343 = vmatprep.subr.mxu0 0.0
        %344 = vmatpush1.xpose.msra.mxu0 %v333
        %345 = vmatprep.subr.mxu0 0.0
        %346 = vmatpush1.xpose.msra.mxu0 %v332
        %347 = vmatprep.subr.mxu0 0.0
        %348 = vmatpush1.xpose.msra.mxu0 %v331
        %349 = vmatprep.subr.mxu0 0.0
        %350 = vmatpush1.xpose.msra.mxu0 %v330
        %351 = vmatprep.subr.mxu0 0.0
        %352 = vmatpush1.xpose.msra.mxu0 %v329
        %353 = vmatprep.subr.mxu0 0.0
        %354 = vmatpush1.xpose.msra.mxu0 %v328
        %355 = vmatprep.subr.mxu0 0.0
        %356 = vmatpush1.xpose.msra.mxu0 %v327
        %357 = vmatprep.subr.mxu0 0.0
        %358 = vmatpush1.xpose.msra.mxu0 %v326
        %359 = vmatprep.subr.mxu0 0.0
        %360 = vmatpush1.xpose.msra.mxu0 %v325
        %361 = vmatprep.subr.mxu0 0.0
        %362 = vmatpush1.xpose.msra.mxu0 %v324
        %363 = vmatprep.subr.mxu0 0.0
        %364 = vmatpush1.xpose.msra.mxu0 %v323
        %365 = vmatprep.subr.mxu0 0.0
        %366 = vmatpush1.xpose.msra.mxu0 %v322
        %367 = vmatprep.subr.mxu0 0.0
        %368 = vmatpush1.xpose.msra.mxu0 %v321
        %369 = vmatprep.subr.mxu0 0.0
        %370 = vmatpush2.xpose.msra.mxu0 0.0
        %371 = vmatprep.subr.mxu0 0.0
        %372 = vmatpush2.xpose.msra.mxu0 0.0
        %373 = vmatprep.subr.mxu0 0.0
        %374 = vmatpush2.xpose.msra.mxu0 0.0
        %375 = vmatprep.subr.mxu0 0.0
        %376 = vmatpush2.xpose.msra.mxu0 0.0
        %377 = vmatprep.subr.mxu0 0.0
        %378 = vmatpush2.xpose.msra.mxu0 0.0
        %379 = vmatprep.subr.mxu0 0.0
        %380 = vmatpush2.xpose.msra.mxu0 0.0
        %381 = vmatprep.subr.mxu0 0.0
        %382 = vmatpush2.xpose.msra.mxu0 0.0
        %383 = vmatprep.subr.mxu0 0.0
        %384 = vmatpush2.xpose.msra.mxu0 0.0
        %385 = vmatprep.subr.mxu0 0.0
        %386 = vmatpush2.xpose.msra.mxu0 0.0
        %387 = vmatprep.subr.mxu0 0.0
        %388 = vmatpush2.xpose.msra.mxu0 0.0
        %389 = vmatprep.subr.mxu0 0.0
        %390 = vmatpush2.xpose.msra.mxu0 0.0
        %391 = vmatprep.subr.mxu0 0.0
        %392 = vmatpush2.xpose.msra.mxu0 0.0
        %393 = vmatprep.subr.mxu0 0.0
        %394 = vmatpush2.xpose.msra.mxu0 0.0
        %395 = vmatprep.subr.mxu0 0.0
        %396 = vmatpush2.xpose.msra.mxu0 0.0
        %397 = vmatprep.subr.mxu0 0.0
        %398 = vmatpush2.xpose.msra.mxu0 0.0
        %399 = vmatprep.subr.mxu0 0.0
        %400 = vmatpush2.xpose.msra.mxu0 0.0
        %401 = vmatprep.mubr.f32.mxu0 0.0
        %402 = vmatmul.mubr.f32.gmra.mxu0 %v320
        %v403 = vpop.f32.mrf.mxu0
        %v404 = vadd.f32 0.0, %v403
        %v405 = vpop.f32.mrf.mxu0
        %406 = vdwg.mxu0
        %407 = vst [vmem:[%s272] sm:$0xff] %v404
        %v408 = vlaneseq
        %v409 = vand.u32 %v408, 127
        %v410 = vld [vmem:[%s292] sm:$0xff]
        %s411 = smul.u32 %s25, 128
        %v412 = vstv %s411
        %v413 = vsub.s32 %v410, %v412
        %414 = vset.pattern.permute.xlu0 0
        %415 = vperm.xlu0 %414, %v413
        %v416 = vpop.permute.xlu0 %415
        %vm417 = vcmp.ne.s32.totalorder %v409, %v416
        %s418 = ssub.s32 200, %s411
        %v419 = vstv %s418
        %vm420 = vcmp.lt.s32.totalorder %v409, %v419
        %vm421 = vmand %vm417, %vm420
        %v422 = vmul.f32 %v404, 30.0
        %v423 = vmul.f32 %v422, 1.442695
        %v424 = vpow.pop %v423
        %v425 = vsel %vm421, %v424, 0.0
        %v426 = vld [vmem:[#allocation4] sm:$0xff]
        %427 = vadd.xlane.f32.xlu0 %v425
        %v428 = vpop.xlane.xlu0 %427
        %v429 = vadd.f32 %v426, %v428
        %vm430 = vcmask 7168
        %431 = vst.msk [vmem:[#allocation4] sm:$0xff] %vm430, %v429
        %p432 = scmp.eq.s32.totalorder %s25, 1
        // Predicated region
        $region41: #{arc_loss.1} parent=35 // pred_check
          %p433 = pneg %p432
        $region42: #{arc_loss.1} parent=35 // pred_check_branch
          %435 = sbr.rel (%p433) target = $region44
        $region43: #{arc_loss.1} parent=35 // pred_region
          %v436 = vld [vmem:[#allocation3] sm:$0xff]
          %v437 = vmax.f32 %v436, -0.9999999
          %v438 = vmin.f32 %v437, 0.9999999
          %v439 = vmul.f32 %v438, 0.921061
          %v440 = vmul.f32 %v438, %v438
          %v441 = vsub.f32 1.0, %v440
          %v442 = vrsqrt.pop %v441
          %v443 = vmul.f32 %v441, %v442
          %vm444 = vcmp.eq.f32.partialorder %v441, inf
          %v445 = vsel %vm444, %v441, %v443
          %vm446 = vcmp.eq.f32.partialorder %v441, 0.0
          %v447 = vand.u32 %v441, 2147483648
          %v448 = vsel %vm446, %v447, %v445
          %v449 = vmul.f32 %v448, 0.38941833
          %v450 = vsub.f32 %v439, %v449
          %v451 = vmul.f32 %v450, 30.0
          %v452 = vmul.f32 %v451, 1.442695
          %v453 = vpow.pop %v452
          %v454 = vld [vmem:[#allocation4] sm:$0xff]
          %v455 = vadd.f32 %v453, %v454
          %v456 = vlog2.pop %v455
          %v457 = vmul.f32 %v456, 0.6931472
          %v458 = vsub.f32 %v451, %v457
          %459 = vst.msk [vmem:[%s300] sm:$0xff] %vm430, %v458
        $region44: #{arc_loss.1} parent=35 // pred_fallthru
          _
        %s460 = sand.u32 %s146, 1
        %s461 = scalar_lea.sflag [#allocation6], %s460
        %s462 = sand.u32 %s146, 1
        %s463 = smul.addr %s462, 8
        %s464 = scalar_lea.vmem [#allocation5], %s463
        %p465 = scmp.lt.s32.totalorder %s24, 1
        %s466 = scalar_select %p465, %s24, 1
        %s467 = smul.addr %s466, 8
        %s468 = scalar_lea.vmem %s5, %s467
        // Predicated region
        $region45: #{arc_loss.1} parent=35 // pred_check
          %p469 = pneg %p156
        $region46: #{arc_loss.1} parent=35 // pred_check_branch
          %471 = sbr.rel (%p469) target = $region48
        $region47: #{arc_loss.1} parent=35 // pred_region
          %s473 = ssub.s32 128, 128
          %474 = vsyncadd %s461, %s473
          %s475 = smul.addr %s24, 2
          %s476 = sadd.s32 %s25, %s475
          %s477 = smul.addr %s476, 128
          %s478 = scalar_lea.hbm %s4, %s477
          %s480 = sshll.u32 %s464, 4
          %s481 = int_to_ptr.vmem [resolvable:$true] %s480
          %483 = dma.vmem_to_hbm [thread:$0]  %s481, 128, %s478, %s461
        $region48: #{arc_loss.1} parent=35 // pred_fallthru
          _
        // Predicated region
        $region49: #{arc_loss.1} parent=35 // pred_check
          %p484 = pneg %p182
        $region50: #{arc_loss.1} parent=35 // pred_check_branch
          %486 = sbr.rel (%p484) target = $region52
        $region51: #{arc_loss.1} parent=35 // pred_region
          _
        $region52: #{arc_loss.1} parent=35 // pred_fallthru
          _
      $region36: #{arc_loss.1} parent=5 // pred_fallthru
        _
      %p487 = scmp.le.s32.totalorder 2, %s15
      // Predicated region
      $region53: #{arc_loss.1} parent=5 // pred_check
        %p488 = pneg %p487
      $region54: #{arc_loss.1} parent=5 // pred_check_branch
        %490 = sbr.rel (%p488) target = $region56
      $region55: #{arc_loss.1} parent=5 // pred_region
        %s491 = ssub.s32 %s15, 2
        // Predicated region
        $region57: #{arc_loss.1} parent=55 // pred_check
          %p492 = pneg %p162
        $region58: #{arc_loss.1} parent=55 // pred_check_branch
          %494 = sbr.rel (%p492) target = $region60
        $region59: #{arc_loss.1} parent=55 // pred_region
          %s495 = sand.u32 %s147, 1
          %s496 = scalar_lea.sflag [#allocation6], %s495
          %s497 = sand.u32 %s147, 1
          %s498 = smul.addr %s497, 8
          %s499 = scalar_lea.vmem [#allocation5], %s498
          %500 = dma.done %s496, 128
        $region60: #{arc_loss.1} parent=55 // pred_fallthru
          _
        // Predicated region
        $region61: #{arc_loss.1} parent=55 // pred_check
          %p501 = pneg %p188
        $region62: #{arc_loss.1} parent=55 // pred_check_branch
          %503 = sbr.rel (%p501) target = $region64
        $region63: #{arc_loss.1} parent=55 // pred_region
          %p504 = scmp.lt.s32.totalorder %s26, 1
          %s505 = scalar_select %p504, %s26, 1
          %s506 = smul.addr %s505, 8
          %s507 = scalar_lea.vmem %s5, %s506
        $region64: #{arc_loss.1} parent=55 // pred_fallthru
          _
      $region56: #{arc_loss.1} parent=5 // pred_fallthru
        _
    $region6: #{arc_loss.1} parent=1 // loop_footer
      %s19 = sadd.s32 1, %s15
    $region7: #{arc_loss.1} parent=1 // loop_footer_branch
      %14 = sbr.rel target = $region3
    $region8: #{arc_loss.1} parent=1 // loop_exit
      _
    %508 = vsyncpa [#allocation6], 1
    %s509 = scalar_lea.sflag [#allocation6], 1
    %510 = vsyncpa %s509, 1

</llo_original>
